<compile_context>
chip_gen: v7x
topology: tpu7x:2x2x1
jax: 0.10.0
libtpu: 0.0.40
codegen_flags: <defaults>
</compile_context>

<pallas_src>
import jax
import jax.numpy as jnp
from jax.experimental import pallas as pl
from jax.experimental.pallas import tpu as pltpu


def _f(x):
    # f(x) = sgn(x) * sqrt(|x|)  (NoisyNet factorized-noise transform)
    return jnp.sign(x) * jnp.sqrt(jnp.abs(x))


def _round_up(x, m):
    return ((x + m - 1) // m) * m


def _sublane_multiple(dtype):
    itemsize = jnp.dtype(dtype).itemsize
    return {4: 8, 2: 16, 1: 32}[itemsize]


def _select_tiles(in_f, out_f, tk=None, tn=None):
    Kp0 = _round_up(in_f, 128)
    Np0 = _round_up(out_f, 128)
    if tk is None:
        tk = min(2048, Kp0)
    if tn is None:
        tn = min(512, Np0)
        # v7x has 2 TensorCores sharded over "parallel" grid axes; when the batch
        # axis collapses to a single tile (common case here), keep >= 2 blocks on
        # the N axis so both cores get work.  No-op on v5e/v6e (1 TC).
        if Np0 // tn < 2 <= Np0 // 128:
            tn = max(128, ((Np0 // 2) // 128) * 128)
    return tk, tn


def noisy_dense_kernel(x_ref, mu_wt_ref, sigma_wt_ref, f_eps_i_ref, f_eps_j_ref,
                       mu_b_ref, sigma_b_ref, o_ref, acc_mu_ref, acc_sig_ref):
    k = pl.program_id(2)

    @pl.when(k == 0)
    def _():
        acc_mu_ref[...] = jnp.zeros_like(acc_mu_ref)
        acc_sig_ref[...] = jnp.zeros_like(acc_sig_ref)

    x = x_ref[...]
    # Input-side factorized noise folded into the activations: a small [tm, tk]
    # VPU op (done in f32 so v5e's f32-only VALU is the natural path), instead of
    # composing the full [tk, tn] noisy weight tile every step.
    x_eps = (x.astype(jnp.float32) * f_eps_i_ref[...]).astype(x.dtype)

    # Two bf16 MXU pushes with f32 accumulation (no composed-weight VMEM temp).
    acc_mu_ref[...] += jnp.dot(x, mu_wt_ref[...],
                               preferred_element_type=jnp.float32)
    acc_sig_ref[...] += jnp.dot(x_eps, sigma_wt_ref[...],
                                preferred_element_type=jnp.float32)

    @pl.when(k == pl.num_programs(2) - 1)
    def _():
        f_eps_j = f_eps_j_ref[...]                                  # f32 [1, tn]
        bias = mu_b_ref[...] + sigma_b_ref[...] * f_eps_j           # noisy bias (f32)
        o_ref[...] = (acc_mu_ref[...] + f_eps_j * acc_sig_ref[...] + bias
                      ).astype(o_ref.dtype)


def prepare_noisy_dense_params(mu_w, sigma_w, mu_b, sigma_b, f_eps_i, f_eps_j,
                               *, compute_dtype=jnp.bfloat16, tk=None, tn=None):
    """One-time prep: transpose weights to [in,out], pad to tile multiples, cast.

    Call this once after init / reset_noise (NOT per forward).  Biases and the
    factorized-noise vectors stay f32 (tiny, and keeps bias math exact).
    """
    out_f, in_f = mu_w.shape
    tk, tn = _select_tiles(in_f, out_f, tk=tk, tn=tn)
    Kp = _round_up(in_f, tk)
    Np = _round_up(out_f, tn)

    mu_wt = jnp.zeros((Kp, Np), compute_dtype).at[:in_f, :out_f].set(
        mu_w.T.astype(compute_dtype))
    sigma_wt = jnp.zeros((Kp, Np), compute_dtype).at[:in_f, :out_f].set(
        sigma_w.T.astype(compute_dtype))
    f_eps_i_row = jnp.zeros((1, Kp), jnp.float32).at[0, :in_f].set(
        f_eps_i.astype(jnp.float32))
    f_eps_j_row = jnp.zeros((1, Np), jnp.float32).at[0, :out_f].set(
        f_eps_j.astype(jnp.float32))
    mu_b_row = jnp.zeros((1, Np), jnp.float32).at[0, :out_f].set(
        mu_b.astype(jnp.float32))
    sigma_b_row = jnp.zeros((1, Np), jnp.float32).at[0, :out_f].set(
        sigma_b.astype(jnp.float32))

    return dict(mu_wt=mu_wt, sigma_wt=sigma_wt,
                f_eps_i=f_eps_i_row, f_eps_j=f_eps_j_row,
                mu_b=mu_b_row, sigma_b=sigma_b_row,
                in_features=in_f, out_features=out_f,
                tk=tk, tn=tn, compute_dtype=compute_dtype)


def noisy_dense(x, prepped, *, out_dtype=None):
    """Factorized NoisyDense forward using prepared (pre-transposed/padded) params.

    y = x @ (mu_w + sigma_w * (f(eps_j) (x) f(eps_i))).T + (mu_b + sigma_b * f(eps_j))
    computed as  x @ mu_w.T + f(eps_j) * ((x * f(eps_i)) @ sigma_w.T) + bias.
    """
    in_f = prepped["in_features"]
    out_f = prepped["out_features"]
    tk, tn = prepped["tk"], prepped["tn"]
    cdt = prepped["compute_dtype"]
    B, x_in = x.shape
    assert x_in == in_f, (x_in, in_f)
    if out_dtype is None:
        out_dtype = x.dtype

    Kp, Np = prepped["mu_wt"].shape
    sub = _sublane_multiple(cdt)
    Bp0 = _round_up(B, sub)
    # Small/moderate batch -> single M tile: each weight byte streamed from HBM
    # exactly once; otherwise tile M at 256.
    tm = Bp0 if Bp0 <= 512 else 256
    Bp = _round_up(B, tm)

    # Per-call activation pad + cast (weights were prepared once, outside).
    xp = jnp.zeros((Bp, Kp), cdt).at[:B, :in_f].set(x.astype(cdt))

    grid = (Bp // tm, Np // tn, Kp // tk)

    out = pl.pallas_call(
        noisy_dense_kernel,
        out_shape=jax.ShapeDtypeStruct((Bp, Np), out_dtype),
        grid_spec=pltpu.PrefetchScalarGridSpec(
            num_scalar_prefetch=0,
            grid=grid,
            in_specs=[
                pl.BlockSpec((tm, tk), lambda i, j, k: (i, k)),   # x           (compute dtype)
                pl.BlockSpec((tk, tn), lambda i, j, k: (k, j)),   # mu_w^T      (compute dtype)
                pl.BlockSpec((tk, tn), lambda i, j, k: (k, j)),   # sigma_w^T   (compute dtype)
                pl.BlockSpec((1, tk), lambda i, j, k: (0, k)),    # f(eps_i) row (f32, lane-dense)
                pl.BlockSpec((1, tn), lambda i, j, k: (0, j)),    # f(eps_j) row (f32)
                pl.BlockSpec((1, tn), lambda i, j, k: (0, j)),    # mu_b         (f32)
                pl.BlockSpec((1, tn), lambda i, j, k: (0, j)),    # sigma_b      (f32)
            ],
            out_specs=pl.BlockSpec((tm, tn), lambda i, j, k: (i, j)),
            scratch_shapes=[pltpu.VMEM((tm, tn), jnp.float32),    # acc for x@mu^T
                            pltpu.VMEM((tm, tn), jnp.float32)],   # acc for (x*eps_i)@sigma^T
        ),
        compiler_params=pltpu.CompilerParams(
            dimension_semantics=("parallel", "parallel", "arbitrary"),
            vmem_limit_bytes=48 * 1024 * 1024),
    )(xp, prepped["mu_wt"], prepped["sigma_wt"], prepped["f_eps_i"],
      prepped["f_eps_j"], prepped["mu_b"], prepped["sigma_b"])

    return out[:B, :out_f]


def init_noisy_dense_params(key, in_features, out_features,
                            initial_sigma=0.5, use_factorized=True):
    """Deterministic parameter + noise init mirroring NoisyDense.__init__ / reset_noise."""
    # TODO(synk): non-factorized path (use_factorized=False) needs a kernel variant
    # that streams the full [out, in] eps_w; only the factorized default is wired in.
    # TODO(synk): bias=False path — pass zero mu_b/sigma_b (kernel always adds bias).
    k_mu_w, k_mu_b, k_eps_i, k_eps_j = jax.random.split(key, 4)
    p = in_features
    if use_factorized:
        mu_init = 1.0 / p ** 0.5
        sigma_init = initial_sigma / p ** 0.5
    else:
        mu_init = (3.0 / p) ** 0.5
        sigma_init = 0.017

    mu_w = jax.random.uniform(k_mu_w, (out_features, in_features),
                              minval=-mu_init, maxval=mu_init, dtype=jnp.float32)
    sigma_w = jnp.full((out_features, in_features), sigma_init, dtype=jnp.float32)
    mu_b = jax.random.uniform(k_mu_b, (out_features,),
                              minval=-mu_init, maxval=mu_init, dtype=jnp.float32)
    sigma_b = jnp.full((out_features,), sigma_init, dtype=jnp.float32)

    # reset_noise (factorized): keep only the two noise vectors (already f-transformed).
    eps_i = jax.random.normal(k_eps_i, (in_features,), dtype=jnp.float32)
    eps_j = jax.random.normal(k_eps_j, (out_features,), dtype=jnp.float32)
    return dict(mu_w=mu_w, sigma_w=sigma_w, mu_b=mu_b, sigma_b=sigma_b,
                f_eps_i=_f(eps_i), f_eps_j=_f(eps_j))


def _reference(x, p):
    eps_w = jnp.outer(p["f_eps_j"], p["f_eps_i"])     # f(eps_j) @ f(eps_i)
    w = p["mu_w"] + p["sigma_w"] * eps_w
    b = p["mu_b"] + p["sigma_b"] * p["f_eps_j"]
    return x @ w.T + b


if __name__ == "__main__":
    key = jax.random.PRNGKey(0)

    # --- check 1: tiny shapes, single-tile grid (bf16 compute, f32 accumulate) ---
    k_params, k_x, key = jax.random.split(key, 3)
    batch, in_features, out_features = 8, 32, 64
    params = init_noisy_dense_params(k_params, in_features, out_features)
    prepped = prepare_noisy_dense_params(
        params["mu_w"], params["sigma_w"], params["mu_b"], params["sigma_b"],
        params["f_eps_i"], params["f_eps_j"], compute_dtype=jnp.bfloat16)
    x = jax.random.normal(k_x, (batch, in_features), dtype=jnp.float32)

    out = jax.block_until_ready(noisy_dense(x, prepped))
    ref = _reference(x, params)
    assert out.shape == (batch, out_features)
    assert jnp.allclose(out, ref, atol=5e-2, rtol=5e-2), float(jnp.abs(out - ref).max())

    # --- check 2: multi-tile grid (2 N blocks, 2 K steps) to exercise accumulation ---
    k_params2, k_x2, key = jax.random.split(key, 3)
    batch2, in2, out2 = 8, 256, 256
    params2 = init_noisy_dense_params(k_params2, in2, out2)
    prepped2 = prepare_noisy_dense_params(
        params2["mu_w"], params2["sigma_w"], params2["mu_b"], params2["sigma_b"],
        params2["f_eps_i"], params2["f_eps_j"],
        compute_dtype=jnp.bfloat16, tk=128, tn=128)
    x2 = jax.random.normal(k_x2, (batch2, in2), dtype=jnp.float32)

    out2_arr = jax.block_until_ready(noisy_dense(x2, prepped2))
    ref2 = _reference(x2, params2)
    assert out2_arr.shape == (batch2, out2)
    assert jnp.allclose(out2_arr, ref2, atol=8e-2, rtol=8e-2), float(jnp.abs(out2_arr - ref2).max())

    print("KERNEL_OK")
</pallas_src>

<mosaic_0001>
module attributes {stable_mosaic.version = 11 : i64} {
  func.func @noisy_dense_kernel(%arg0: i32, %arg1: i32, %arg2: i32, %arg3: memref<16x128xbf16, #tpu.memory_space<vmem>>, %arg4: memref<128x128xbf16, #tpu.memory_space<vmem>>, %arg5: memref<128x128xbf16, #tpu.memory_space<vmem>>, %arg6: memref<1x128xf32, #tpu.memory_space<vmem>>, %arg7: memref<1x128xf32, #tpu.memory_space<vmem>>, %arg8: memref<1x128xf32, #tpu.memory_space<vmem>>, %arg9: memref<1x128xf32, #tpu.memory_space<vmem>>, %arg10: memref<16x128xf32, #tpu.memory_space<vmem>>, %arg11: memref<16x128xf32, #tpu.memory_space<vmem>>, %arg12: memref<16x128xf32, #tpu.memory_space<vmem>>) attributes {dimension_semantics = [#tpu.dimension_semantics<parallel>, #tpu.dimension_semantics<parallel>, #tpu.dimension_semantics<arbitrary>], iteration_bounds = array<i64: 1, 1, 1>, scalar_prefetch = 0 : i64, scratch_operands = 2 : i64, tpu.core_type = #tpu.core_type<tc>, window_params = [{transform_indices = @transform_0, window_bounds = array<i64: 16, 128>}, {transform_indices = @transform_1, window_bounds = array<i64: 128, 128>}, {transform_indices = @transform_2, window_bounds = array<i64: 128, 128>}, {transform_indices = @transform_3, window_bounds = array<i64: 1, 128>}, {transform_indices = @transform_4, window_bounds = array<i64: 1, 128>}, {transform_indices = @transform_5, window_bounds = array<i64: 1, 128>}, {transform_indices = @transform_6, window_bounds = array<i64: 1, 128>}, {transform_indices = @transform_7, window_bounds = array<i64: 16, 128>}]} {
    %c0_i32 = arith.constant 0 : i32
    %0 = arith.cmpi eq, %arg2, %c0_i32 : i32
    %1 = arith.extui %0 : i1 to i32
    %c0_i32_0 = arith.constant 0 : i32
    %2 = arith.cmpi ne, %1, %c0_i32_0 : i32
    scf.if %2 {
      %cst_19 = arith.constant 0.000000e+00 : f32
      %22 = vector.broadcast %cst_19 : f32 to vector<16x128xf32>
      %c0_20 = arith.constant 0 : index
      %c0_21 = arith.constant 0 : index
      %23 = vector.load %arg11[%c0_20, %c0_21] : memref<16x128xf32, #tpu.memory_space<vmem>>, vector<16x128xf32>
      tpu.vector_store %arg11[%c0_20, %c0_21], %22 {strides = array<i32>} : memref<16x128xf32, #tpu.memory_space<vmem>>, vector<16x128xf32>,
      %cst_22 = arith.constant 0.000000e+00 : f32
      %24 = vector.broadcast %cst_22 : f32 to vector<16x128xf32>
      %c0_23 = arith.constant 0 : index
      %c0_24 = arith.constant 0 : index
      %25 = vector.load %arg12[%c0_23, %c0_24] : memref<16x128xf32, #tpu.memory_space<vmem>>, vector<16x128xf32>
      tpu.vector_store %arg12[%c0_23, %c0_24], %24 {strides = array<i32>} : memref<16x128xf32, #tpu.memory_space<vmem>>, vector<16x128xf32>,
    } else {
    }
    %c0 = arith.constant 0 : index
    %c0_1 = arith.constant 0 : index
    %3 = vector.load %arg3[%c0, %c0_1] : memref<16x128xbf16, #tpu.memory_space<vmem>>, vector<16x128xbf16>
    %4 = arith.extf %3 : vector<16x128xbf16> to vector<16x128xf32>
    %c0_2 = arith.constant 0 : index
    %c0_3 = arith.constant 0 : index
    %5 = vector.load %arg6[%c0_2, %c0_3] : memref<1x128xf32, #tpu.memory_space<vmem>>, vector<1x128xf32>
    %6 = vector.broadcast %5 : vector<1x128xf32> to vector<16x128xf32>
    %7 = arith.mulf %4, %6 : vector<16x128xf32>
    %8 = arith.truncf %7 : vector<16x128xf32> to vector<16x128xbf16>
    %c0_4 = arith.constant 0 : index
    %c0_5 = arith.constant 0 : index
    %9 = vector.load %arg11[%c0_4, %c0_5] : memref<16x128xf32, #tpu.memory_space<vmem>>, vector<16x128xf32>
    %c0_6 = arith.constant 0 : index
    %c0_7 = arith.constant 0 : index
    %10 = vector.load %arg4[%c0_6, %c0_7] : memref<128x128xbf16, #tpu.memory_space<vmem>>, vector<128x128xbf16>
    %cst = arith.constant dense<0.000000e+00> : vector<16x128xf32>
    %11 = tpu.matmul %3, %10, %cst {dimension_numbers = #tpu.dot_dimension_numbers<[1], [0], [0], [1], [0, 0, 1, 1], [], []>} : vector<16x128xbf16>, vector<128x128xbf16>, vector<16x128xf32> -> vector<16x128xf32>
    %12 = arith.addf %9, %11 : vector<16x128xf32>
    %c0_8 = arith.constant 0 : index
    %c0_9 = arith.constant 0 : index
    %13 = vector.load %arg11[%c0_8, %c0_9] : memref<16x128xf32, #tpu.memory_space<vmem>>, vector<16x128xf32>
    tpu.vector_store %arg11[%c0_8, %c0_9], %12 {strides = array<i32>} : memref<16x128xf32, #tpu.memory_space<vmem>>, vector<16x128xf32>,
    %c0_10 = arith.constant 0 : index
    %c0_11 = arith.constant 0 : index
    %14 = vector.load %arg12[%c0_10, %c0_11] : memref<16x128xf32, #tpu.memory_space<vmem>>, vector<16x128xf32>
    %c0_12 = arith.constant 0 : index
    %c0_13 = arith.constant 0 : index
    %15 = vector.load %arg5[%c0_12, %c0_13] : memref<128x128xbf16, #tpu.memory_space<vmem>>, vector<128x128xbf16>
    %cst_14 = arith.constant dense<0.000000e+00> : vector<16x128xf32>
    %16 = tpu.matmul %8, %15, %cst_14 {dimension_numbers = #tpu.dot_dimension_numbers<[1], [0], [0], [1], [0, 0, 1, 1], [], []>} : vector<16x128xbf16>, vector<128x128xbf16>, vector<16x128xf32> -> vector<16x128xf32>
    %17 = arith.addf %14, %16 : vector<16x128xf32>
    %c0_15 = arith.constant 0 : index
    %c0_16 = arith.constant 0 : index
    %18 = vector.load %arg12[%c0_15, %c0_16] : memref<16x128xf32, #tpu.memory_space<vmem>>, vector<16x128xf32>
    tpu.vector_store %arg12[%c0_15, %c0_16], %17 {strides = array<i32>} : memref<16x128xf32, #tpu.memory_space<vmem>>, vector<16x128xf32>,
    %c0_i32_17 = arith.constant 0 : i32
    %19 = arith.cmpi eq, %arg2, %c0_i32_17 : i32
    %20 = arith.extui %19 : i1 to i32
    %c0_i32_18 = arith.constant 0 : i32
    %21 = arith.cmpi ne, %20, %c0_i32_18 : i32
    scf.if %21 {
      %c0_19 = arith.constant 0 : index
      %c0_20 = arith.constant 0 : index
      %22 = vector.load %arg7[%c0_19, %c0_20] : memref<1x128xf32, #tpu.memory_space<vmem>>, vector<1x128xf32>
      %c0_21 = arith.constant 0 : index
      %c0_22 = arith.constant 0 : index
      %23 = vector.load %arg8[%c0_21, %c0_22] : memref<1x128xf32, #tpu.memory_space<vmem>>, vector<1x128xf32>
      %c0_23 = arith.constant 0 : index
      %c0_24 = arith.constant 0 : index
      %24 = vector.load %arg9[%c0_23, %c0_24] : memref<1x128xf32, #tpu.memory_space<vmem>>, vector<1x128xf32>
      %25 = arith.mulf %24, %22 : vector<1x128xf32>
      %26 = arith.addf %23, %25 : vector<1x128xf32>
      %c0_25 = arith.constant 0 : index
      %c0_26 = arith.constant 0 : index
      %27 = vector.load %arg11[%c0_25, %c0_26] : memref<16x128xf32, #tpu.memory_space<vmem>>, vector<16x128xf32>
      %c0_27 = arith.constant 0 : index
      %c0_28 = arith.constant 0 : index
      %28 = vector.load %arg12[%c0_27, %c0_28] : memref<16x128xf32, #tpu.memory_space<vmem>>, vector<16x128xf32>
      %29 = vector.broadcast %22 : vector<1x128xf32> to vector<16x128xf32>
      %30 = arith.mulf %29, %28 : vector<16x128xf32>
      %31 = arith.addf %27, %30 : vector<16x128xf32>
      %32 = vector.broadcast %26 : vector<1x128xf32> to vector<16x128xf32>
      %33 = arith.addf %31, %32 : vector<16x128xf32>
      %c0_29 = arith.constant 0 : index
      %c0_30 = arith.constant 0 : index
      %34 = vector.load %arg10[%c0_29, %c0_30] : memref<16x128xf32, #tpu.memory_space<vmem>>, vector<16x128xf32>
      tpu.vector_store %arg10[%c0_29, %c0_30], %33 {strides = array<i32>} : memref<16x128xf32, #tpu.memory_space<vmem>>, vector<16x128xf32>,
    } else {
    }
    return
  }
  func.func @transform_0(%arg0: i32, %arg1: i32, %arg2: i32) -> (i32, i32) {
    %c0_i32 = arith.constant 0 : i32
    return %arg0, %arg2 : i32, i32
  }
  func.func @transform_1(%arg0: i32, %arg1: i32, %arg2: i32) -> (i32, i32) {
    %c0_i32 = arith.constant 0 : i32
    return %arg2, %arg1 : i32, i32
  }
  func.func @transform_2(%arg0: i32, %arg1: i32, %arg2: i32) -> (i32, i32) {
    %c0_i32 = arith.constant 0 : i32
    return %arg2, %arg1 : i32, i32
  }
  func.func @transform_3(%arg0: i32, %arg1: i32, %arg2: i32) -> (i32, i32) {
    %c0_i32 = arith.constant 0 : i32
    %c0_i32_0 = arith.constant 0 : i32
    return %c0_i32, %arg2 : i32, i32
  }
  func.func @transform_4(%arg0: i32, %arg1: i32, %arg2: i32) -> (i32, i32) {
    %c0_i32 = arith.constant 0 : i32
    %c0_i32_0 = arith.constant 0 : i32
    return %c0_i32, %arg1 : i32, i32
  }
  func.func @transform_5(%arg0: i32, %arg1: i32, %arg2: i32) -> (i32, i32) {
    %c0_i32 = arith.constant 0 : i32
    %c0_i32_0 = arith.constant 0 : i32
    return %c0_i32, %arg1 : i32, i32
  }
  func.func @transform_6(%arg0: i32, %arg1: i32, %arg2: i32) -> (i32, i32) {
    %c0_i32 = arith.constant 0 : i32
    %c0_i32_0 = arith.constant 0 : i32
    return %c0_i32, %arg1 : i32, i32
  }
  func.func @transform_7(%arg0: i32, %arg1: i32, %arg2: i32) -> (i32, i32) {
    %c0_i32 = arith.constant 0 : i32
    return %arg0, %arg1 : i32, i32
  }
}

</mosaic_0001>

<llo_original>
// kernel: tpu_custom_call.1
$region0: #{tpu_custom_call.1}
  #allocation0 [shape = 'u32[]', space=smem, size = 0x4, offset = 0x4, fixed_abs, tag = 'smem constant byte address 0x4 - core index']
  #allocation1 [shape = 'u32[144,128]{1,0:T(1,128)}', space=vmem, size = 0x12000, scoped, tag = 'internal scratch']
  #allocation2 [shape = 'f32[16,128]{1,0:T(8,128)}', space=vmem, size = 0x2000, scoped, tag = 'scratch operand']
  #allocation3 [shape = 'f32[16,128]{1,0:T(8,128)}', space=vmem, size = 0x2000, scoped, tag = 'scratch operand']
  %s0 = inlined_call_operand.hbm [shape: bf16[16,128], index: 0, kind: input, shape index: {}]
  %s1 = inlined_call_operand.hbm [shape: bf16[128,128], index: 1, kind: input, shape index: {}]
  %s2 = inlined_call_operand.hbm [shape: bf16[128,128], index: 2, kind: input, shape index: {}]
  %s3 = inlined_call_operand.vmem [shape: f32[1,128], index: 3, kind: input, shape index: {}]
  %s4 = inlined_call_operand.vmem [shape: f32[1,128], index: 4, kind: input, shape index: {}]
  %s5 = inlined_call_operand.vmem [shape: f32[1,128], index: 5, kind: input, shape index: {}]
  %s6 = inlined_call_operand.vmem [shape: f32[1,128], index: 6, kind: input, shape index: {}]
  %s7 = inlined_call_operand.hbm [shape: f32[16,128], index: 7, kind: output, shape index: {}]
  %s8 = sld [smem:[#allocation0]]
  $region58: #{tpu_custom_call.1} parent=0
    _
  %s10 = ssub.s32 1, %s8
  %s11 = scalar_select 0, %s10, %s8
  $region1: #{tpu_custom_call.1} parent=0
    #allocation4 [shape = 'u8[4096]{0}', space=vmem, size = 0x1000, scoped, tag = 'input window, operand 0, single buffered']
    #allocation5 [shape = 's32[1]{0}', space=sflag, size = 0x4, scoped, tag = 'scoped memory for tpu_custom_call.1']
    #allocation6 [shape = 's32[1]{0}', space=sflag, size = 0x4, scoped, tag = 'scoped memory for tpu_custom_call.1']
    #allocation7 [shape = 'u8[32768]{0}', space=vmem, size = 0x8000, scoped, tag = 'input window, operand 1, single buffered']
    #allocation8 [shape = 's32[1]{0}', space=sflag, size = 0x4, scoped, tag = 'scoped memory for tpu_custom_call.1']
    #allocation9 [shape = 'u8[32768]{0}', space=vmem, size = 0x8000, scoped, tag = 'input window, operand 2, single buffered']
    #allocation10 [shape = 'u8[8192]{0}', space=vmem, size = 0x2000, scoped, tag = 'output window, operand 0, single buffered']
    %12 = vsyncpa [#allocation5], 0
    %13 = vsyncpa [#allocation8], 0
    %14 = vsyncpa [#allocation6], 0
    // Predicated region
    $region2: #{tpu_custom_call.1} parent=1 // pred_check
      _
    $region3: #{tpu_custom_call.1} parent=1 // pred_check_branch
      %16 = sbr.rel (0) target = $region5
    $region4: #{tpu_custom_call.1} parent=1 // pred_region
      %s18 = ssub.s32 128, 128
      %19 = vsyncadd [#allocation5], %s18
      %s20 = sshll.u32 [#allocation4], 4
      %s21 = int_to_ptr.vmem [resolvable:$true] %s20
      %26 = dma.hbm_to_vmem [thread:$0]  %s0, 128, %s21, [#allocation5], 64, 64, 4
    $region5: #{tpu_custom_call.1} parent=1 // pred_fallthru
      _
    // Predicated region
    $region6: #{tpu_custom_call.1} parent=1 // pred_check
      _
    $region7: #{tpu_custom_call.1} parent=1 // pred_check_branch
      %28 = sbr.rel (0) target = $region9
    $region8: #{tpu_custom_call.1} parent=1 // pred_region
      %s30 = ssub.s32 1024, 1024
      %31 = vsyncadd [#allocation8], %s30
      %s32 = sshll.u32 [#allocation7], 4
      %s33 = int_to_ptr.vmem [resolvable:$true] %s32
      %38 = dma.hbm_to_vmem [thread:$0]  %s1, 1024, %s33, [#allocation8], 64, 64, 4
    $region9: #{tpu_custom_call.1} parent=1 // pred_fallthru
      _
    // Predicated region
    $region10: #{tpu_custom_call.1} parent=1 // pred_check
      _
    $region11: #{tpu_custom_call.1} parent=1 // pred_check_branch
      %40 = sbr.rel (0) target = $region13
    $region12: #{tpu_custom_call.1} parent=1 // pred_region
      %s42 = ssub.s32 1024, 1024
      %43 = vsyncadd [#allocation8], %s42
      %s44 = sshll.u32 [#allocation9], 4
      %s45 = int_to_ptr.vmem [resolvable:$true] %s44
      %50 = dma.hbm_to_vmem [thread:$0]  %s2, 1024, %s45, [#allocation8], 64, 64, 4
    $region13: #{tpu_custom_call.1} parent=1 // pred_fallthru
      _
    // Predicated region
    $region14: #{tpu_custom_call.1} parent=1 // pred_check
      _
    $region15: #{tpu_custom_call.1} parent=1 // pred_check_branch
      %52 = sbr.rel (0) target = $region17
    $region16: #{tpu_custom_call.1} parent=1 // pred_region
      _
    $region17: #{tpu_custom_call.1} parent=1 // pred_fallthru
      _
    // Predicated region
    $region18: #{tpu_custom_call.1} parent=1 // pred_check
      _
    $region19: #{tpu_custom_call.1} parent=1 // pred_check_branch
      %54 = sbr.rel (0) target = $region21
    $region20: #{tpu_custom_call.1} parent=1 // pred_region
      _
    $region21: #{tpu_custom_call.1} parent=1 // pred_fallthru
      _
    // Predicated region
    $region22: #{tpu_custom_call.1} parent=1 // pred_check
      _
    $region23: #{tpu_custom_call.1} parent=1 // pred_check_branch
      %56 = sbr.rel (0) target = $region25
    $region24: #{tpu_custom_call.1} parent=1 // pred_region
      _
    $region25: #{tpu_custom_call.1} parent=1 // pred_fallthru
      _
    // Predicated region
    $region26: #{tpu_custom_call.1} parent=1 // pred_check
      _
    $region27: #{tpu_custom_call.1} parent=1 // pred_check_branch
      %58 = sbr.rel (0) target = $region29
    $region28: #{tpu_custom_call.1} parent=1 // pred_region
      _
    $region29: #{tpu_custom_call.1} parent=1 // pred_fallthru
      _
    // Predicated region
    $region30: #{tpu_custom_call.1} parent=1 // pred_check
      _
    $region31: #{tpu_custom_call.1} parent=1 // pred_check_branch
      %60 = sbr.rel (0) target = $region33
    $region32: #{tpu_custom_call.1} parent=1 // pred_region
      %61 = dma.done [#allocation5], 128
    $region33: #{tpu_custom_call.1} parent=1 // pred_fallthru
      _
    // Predicated region
    $region34: #{tpu_custom_call.1} parent=1 // pred_check
      _
    $region35: #{tpu_custom_call.1} parent=1 // pred_check_branch
      %63 = sbr.rel (0) target = $region37
    $region36: #{tpu_custom_call.1} parent=1 // pred_region
      %64 = dma.done [#allocation8], 1024
    $region37: #{tpu_custom_call.1} parent=1 // pred_fallthru
      _
    // Predicated region
    $region38: #{tpu_custom_call.1} parent=1 // pred_check
      _
    $region39: #{tpu_custom_call.1} parent=1 // pred_check_branch
      %66 = sbr.rel (0) target = $region41
    $region40: #{tpu_custom_call.1} parent=1 // pred_region
      %67 = dma.done [#allocation8], 1024
    $region41: #{tpu_custom_call.1} parent=1 // pred_fallthru
      _
    %p69 = scmp.eq.s32.totalorder 0, 0
    // Predicated region
    $region42: #{tpu_custom_call.1} parent=1 // pred_check
      %p70 = pneg %p69
    $region43: #{tpu_custom_call.1} parent=1 // pred_check_branch
      %72 = sbr.rel (%p70) target = $region45
    $region44: #{tpu_custom_call.1} parent=1 // pred_region
      %73 = vst [vmem:[#allocation2] sm:$0xff] 0.0
      %74 = vst [vmem:[#allocation2 + $0x8] sm:$0xff] 0.0
      %75 = vst [vmem:[#allocation3] sm:$0xff] 0.0
      %76 = vst [vmem:[#allocation3 + $0x8] sm:$0xff] 0.0
    $region45: #{tpu_custom_call.1} parent=1 // pred_fallthru
      _
    %v77 = vld [vmem:[#allocation4] sm:$0xf]
    %v78 = vld [vmem:[#allocation4 + $0x4] sm:$0xf]
    %v79 = vunpack.c.l.bf16 %v77
    %v80 = vunpack.c.l.bf16 %v78
    %v81 = vld [vmem:[%s3] sm:$0x1]
    %v83 = vlaneseq
    %v84 = vshrl.u32 %v83, 7
    %v85 = vsub.s32 0, %v84
    %v86 = vrot.slane %v81, %v85
    %v88 = vmul.f32 %v79, %v86
    %v89 = vmul.f32 %v80, %v86
    %v90 = vpack.c.bf16 %v89, %v88
    %v91 = vld [vmem:[#allocation2] sm:$0xff]
    %v92 = vld [vmem:[#allocation2 + $0x8] sm:$0xff]
    %v93 = vld [vmem:[#allocation7] sm:$0xf]
    %v94 = vld [vmem:[#allocation7 + $0x4] sm:$0xf]
    %v95 = vld [vmem:[#allocation7 + $0x8] sm:$0xf]
    %v96 = vld [vmem:[#allocation7 + $0xc] sm:$0xf]
    %v97 = vld [vmem:[#allocation7 + $0x10] sm:$0xf]
    %v98 = vld [vmem:[#allocation7 + $0x14] sm:$0xf]
    %v99 = vld [vmem:[#allocation7 + $0x18] sm:$0xf]
    %v100 = vld [vmem:[#allocation7 + $0x1c] sm:$0xf]
    %v101 = vld [vmem:[#allocation7 + $0x20] sm:$0xf]
    %v102 = vld [vmem:[#allocation7 + $0x24] sm:$0xf]
    %v103 = vld [vmem:[#allocation7 + $0x28] sm:$0xf]
    %v104 = vld [vmem:[#allocation7 + $0x2c] sm:$0xf]
    %v105 = vld [vmem:[#allocation7 + $0x30] sm:$0xf]
    %v106 = vld [vmem:[#allocation7 + $0x34] sm:$0xf]
    %v107 = vld [vmem:[#allocation7 + $0x38] sm:$0xf]
    %v108 = vld [vmem:[#allocation7 + $0x3c] sm:$0xf]
    %v111 = vunpack.c.l.b16 %v77
    %v112 = vunpack.c.l.b16 %v78
    %v113 = vpack.c.b16 %v112, %v111
    %v131 = vunpack.c.l.b16 %v93
    %v132 = vunpack.c.l.b16 %v94
    %v133 = vunpack.c.l.b16 %v95
    %v134 = vunpack.c.l.b16 %v96
    %v135 = vunpack.c.l.b16 %v97
    %v136 = vunpack.c.l.b16 %v98
    %v137 = vunpack.c.l.b16 %v99
    %v138 = vunpack.c.l.b16 %v100
    %v139 = vunpack.c.l.b16 %v101
    %v140 = vunpack.c.l.b16 %v102
    %v141 = vunpack.c.l.b16 %v103
    %v142 = vunpack.c.l.b16 %v104
    %v143 = vunpack.c.l.b16 %v105
    %v144 = vunpack.c.l.b16 %v106
    %v145 = vunpack.c.l.b16 %v107
    %v146 = vunpack.c.l.b16 %v108
    %v147 = vpack.c.b16 %v132, %v131
    %v148 = vpack.c.b16 %v134, %v133
    %v149 = vpack.c.b16 %v136, %v135
    %v150 = vpack.c.b16 %v138, %v137
    %v151 = vpack.c.b16 %v140, %v139
    %v152 = vpack.c.b16 %v142, %v141
    %v153 = vpack.c.b16 %v144, %v143
    %v154 = vpack.c.b16 %v146, %v145
    %163 = vmatprep.subr.bf16.mxu0 0
    %164 = vmatpush1.bf16.msra.mxu0 %v147
    %165 = vmatprep.subr.bf16.mxu0 0
    %166 = vmatpush1.bf16.msra.mxu0 %v148
    %167 = vmatprep.subr.bf16.mxu0 0
    %168 = vmatpush1.bf16.msra.mxu0 %v149
    %169 = vmatprep.subr.bf16.mxu0 0
    %170 = vmatpush1.bf16.msra.mxu0 %v150
    %171 = vmatprep.subr.bf16.mxu0 0
    %172 = vmatpush1.bf16.msra.mxu0 %v151
    %173 = vmatprep.subr.bf16.mxu0 0
    %174 = vmatpush1.bf16.msra.mxu0 %v152
    %175 = vmatprep.subr.bf16.mxu0 0
    %176 = vmatpush1.bf16.msra.mxu0 %v153
    %177 = vmatprep.subr.bf16.mxu0 0
    %178 = vmatpush1.bf16.msra.mxu0 %v154
    %179 = vmatprep.subr.bf16.mxu0 0
    %180 = vmatpush1.bf16.msra.mxu0 0
    %181 = vmatprep.subr.bf16.mxu0 0
    %182 = vmatpush1.bf16.msra.mxu0 0
    %183 = vmatprep.subr.bf16.mxu0 0
    %184 = vmatpush1.bf16.msra.mxu0 0
    %185 = vmatprep.subr.bf16.mxu0 0
    %186 = vmatpush1.bf16.msra.mxu0 0
    %187 = vmatprep.subr.bf16.mxu0 0
    %188 = vmatpush1.bf16.msra.mxu0 0
    %189 = vmatprep.subr.bf16.mxu0 0
    %190 = vmatpush1.bf16.msra.mxu0 0
    %191 = vmatprep.subr.bf16.mxu0 0
    %192 = vmatpush1.bf16.msra.mxu0 0
    %193 = vmatprep.subr.bf16.mxu0 0
    %194 = vmatpush1.bf16.msra.mxu0 0
    %195 = vmatprep.mubr.bf16.mxu0 0
    %196 = vmatmul.mubr.bf16.gmra.mrb[0].mxu0 %v113
    %v197 = vpop.f32.mrb[0].mxu0
    %v198 = vadd.f32 0.0, %v197
    %v199 = vpop.f32.mrb[0].mxu0
    %v200 = vpop.f32.mrb[0].mxu0
    %v201 = vadd.f32 0.0, %v200
    %v202 = vpop.f32.mrb[0].mxu0
    %203 = vdwg.mxu0
    %v204 = vadd.f32 %v91, %v198
    %v205 = vadd.f32 %v92, %v201
    %206 = vst [vmem:[#allocation2] sm:$0xff] %v204
    %207 = vst [vmem:[#allocation2 + $0x8] sm:$0xff] %v205
    %v208 = vld [vmem:[#allocation3] sm:$0xff]
    %v209 = vld [vmem:[#allocation3 + $0x8] sm:$0xff]
    %v210 = vld [vmem:[#allocation9] sm:$0xf]
    %v211 = vld [vmem:[#allocation9 + $0x4] sm:$0xf]
    %v212 = vld [vmem:[#allocation9 + $0x8] sm:$0xf]
    %v213 = vld [vmem:[#allocation9 + $0xc] sm:$0xf]
    %v214 = vld [vmem:[#allocation9 + $0x10] sm:$0xf]
    %v215 = vld [vmem:[#allocation9 + $0x14] sm:$0xf]
    %v216 = vld [vmem:[#allocation9 + $0x18] sm:$0xf]
    %v217 = vld [vmem:[#allocation9 + $0x1c] sm:$0xf]
    %v218 = vld [vmem:[#allocation9 + $0x20] sm:$0xf]
    %v219 = vld [vmem:[#allocation9 + $0x24] sm:$0xf]
    %v220 = vld [vmem:[#allocation9 + $0x28] sm:$0xf]
    %v221 = vld [vmem:[#allocation9 + $0x2c] sm:$0xf]
    %v222 = vld [vmem:[#allocation9 + $0x30] sm:$0xf]
    %v223 = vld [vmem:[#allocation9 + $0x34] sm:$0xf]
    %v224 = vld [vmem:[#allocation9 + $0x38] sm:$0xf]
    %v225 = vld [vmem:[#allocation9 + $0x3c] sm:$0xf]
    %v242 = vunpack.c.l.b16 %v210
    %v243 = vunpack.c.l.b16 %v211
    %v244 = vunpack.c.l.b16 %v212
    %v245 = vunpack.c.l.b16 %v213
    %v246 = vunpack.c.l.b16 %v214
    %v247 = vunpack.c.l.b16 %v215
    %v248 = vunpack.c.l.b16 %v216
    %v249 = vunpack.c.l.b16 %v217
    %v250 = vunpack.c.l.b16 %v218
    %v251 = vunpack.c.l.b16 %v219
    %v252 = vunpack.c.l.b16 %v220
    %v253 = vunpack.c.l.b16 %v221
    %v254 = vunpack.c.l.b16 %v222
    %v255 = vunpack.c.l.b16 %v223
    %v256 = vunpack.c.l.b16 %v224
    %v257 = vunpack.c.l.b16 %v225
    %v258 = vpack.c.b16 %v243, %v242
    %v259 = vpack.c.b16 %v245, %v244
    %v260 = vpack.c.b16 %v247, %v246
    %v261 = vpack.c.b16 %v249, %v248
    %v262 = vpack.c.b16 %v251, %v250
    %v263 = vpack.c.b16 %v253, %v252
    %v264 = vpack.c.b16 %v255, %v254
    %v265 = vpack.c.b16 %v257, %v256
    %274 = vmatprep.subr.bf16.mxu0 0
    %275 = vmatpush1.bf16.msra.mxu0 %v258
    %276 = vmatprep.subr.bf16.mxu0 0
    %277 = vmatpush1.bf16.msra.mxu0 %v259
    %278 = vmatprep.subr.bf16.mxu0 0
    %279 = vmatpush1.bf16.msra.mxu0 %v260
    %280 = vmatprep.subr.bf16.mxu0 0
    %281 = vmatpush1.bf16.msra.mxu0 %v261
    %282 = vmatprep.subr.bf16.mxu0 0
    %283 = vmatpush1.bf16.msra.mxu0 %v262
    %284 = vmatprep.subr.bf16.mxu0 0
    %285 = vmatpush1.bf16.msra.mxu0 %v263
    %286 = vmatprep.subr.bf16.mxu0 0
    %287 = vmatpush1.bf16.msra.mxu0 %v264
    %288 = vmatprep.subr.bf16.mxu0 0
    %289 = vmatpush1.bf16.msra.mxu0 %v265
    %290 = vmatprep.subr.bf16.mxu0 0
    %291 = vmatpush1.bf16.msra.mxu0 0
    %292 = vmatprep.subr.bf16.mxu0 0
    %293 = vmatpush1.bf16.msra.mxu0 0
    %294 = vmatprep.subr.bf16.mxu0 0
    %295 = vmatpush1.bf16.msra.mxu0 0
    %296 = vmatprep.subr.bf16.mxu0 0
    %297 = vmatpush1.bf16.msra.mxu0 0
    %298 = vmatprep.subr.bf16.mxu0 0
    %299 = vmatpush1.bf16.msra.mxu0 0
    %300 = vmatprep.subr.bf16.mxu0 0
    %301 = vmatpush1.bf16.msra.mxu0 0
    %302 = vmatprep.subr.bf16.mxu0 0
    %303 = vmatpush1.bf16.msra.mxu0 0
    %304 = vmatprep.subr.bf16.mxu0 0
    %305 = vmatpush1.bf16.msra.mxu0 0
    %306 = vmatprep.mubr.bf16.mxu0 0
    %307 = vmatmul.mubr.bf16.gmra.mrb[0].mxu0 %v90
    %v308 = vpop.f32.mrb[0].mxu0
    %v309 = vadd.f32 0.0, %v308
    %v310 = vpop.f32.mrb[0].mxu0
    %v311 = vpop.f32.mrb[0].mxu0
    %v312 = vadd.f32 0.0, %v311
    %v313 = vpop.f32.mrb[0].mxu0
    %314 = vdwg.mxu0
    %v315 = vadd.f32 %v208, %v309
    %v316 = vadd.f32 %v209, %v312
    %317 = vst [vmem:[#allocation3] sm:$0xff] %v315
    %318 = vst [vmem:[#allocation3 + $0x8] sm:$0xff] %v316
    // Predicated region
    $region46: #{tpu_custom_call.1} parent=1 // pred_check
      %p319 = pneg %p69
    $region47: #{tpu_custom_call.1} parent=1 // pred_check_branch
      %321 = sbr.rel (%p319) target = $region49
    $region48: #{tpu_custom_call.1} parent=1 // pred_region
      %v322 = vld [vmem:[%s4] sm:$0x1]
      %v323 = vld [vmem:[%s5] sm:$0x1]
      %v324 = vld [vmem:[%s6] sm:$0x1]
      %v325 = vmul.f32 %v324, %v322
      %v326 = vadd.f32 %v323, %v325
      %v327 = vld [vmem:[#allocation2] sm:$0xff]
      %v328 = vld [vmem:[#allocation2 + $0x8] sm:$0xff]
      %v329 = vld [vmem:[#allocation3] sm:$0xff]
      %v330 = vld [vmem:[#allocation3 + $0x8] sm:$0xff]
      %v332 = vlaneseq
      %v333 = vshrl.u32 %v332, 7
      %v334 = vsub.s32 0, %v333
      %v335 = vrot.slane %v322, %v334
      %v337 = vmul.f32 %v335, %v329
      %v338 = vmul.f32 %v335, %v330
      %v339 = vadd.f32 %v327, %v337
      %v340 = vadd.f32 %v328, %v338
      %v342 = vlaneseq
      %v343 = vshrl.u32 %v342, 7
      %v344 = vsub.s32 0, %v343
      %v345 = vrot.slane %v326, %v344
      %v347 = vadd.f32 %v339, %v345
      %v348 = vadd.f32 %v340, %v345
      %349 = vst [vmem:[#allocation10] sm:$0xff] %v347
      %350 = vst [vmem:[#allocation10 + $0x8] sm:$0xff] %v348
    $region49: #{tpu_custom_call.1} parent=1 // pred_fallthru
      _
    // Predicated region
    $region50: #{tpu_custom_call.1} parent=1 // pred_check
      _
    $region51: #{tpu_custom_call.1} parent=1 // pred_check_branch
      %352 = sbr.rel (0) target = $region53
    $region52: #{tpu_custom_call.1} parent=1 // pred_region
      %s354 = ssub.s32 256, 256
      %355 = vsyncadd [#allocation6], %s354
      %s356 = sshll.u32 [#allocation10], 4
      %s357 = int_to_ptr.vmem [resolvable:$true] %s356
      %362 = dma.vmem_to_hbm [thread:$0]  %s357, 256, %s7, [#allocation6], 128, 128, 8
    $region53: #{tpu_custom_call.1} parent=1 // pred_fallthru
      _
    // Predicated region
    $region54: #{tpu_custom_call.1} parent=1 // pred_check
      _
    $region55: #{tpu_custom_call.1} parent=1 // pred_check_branch
      %364 = sbr.rel (0) target = $region57
    $region56: #{tpu_custom_call.1} parent=1 // pred_region
      %365 = dma.done [#allocation6], 256
    $region57: #{tpu_custom_call.1} parent=1 // pred_fallthru
      _
    %366 = vsyncpa [#allocation5], 1
    %367 = vsyncpa [#allocation8], 1
    %368 = vsyncpa [#allocation6], 1

</llo_original>
